<compile_context>
chip_gen: v5e
topology: v5e:2x2
jax: 0.10.0
libtpu: 0.0.40
codegen_flags: <defaults>
</compile_context>

<pallas_src>
import functools

import jax
import jax.numpy as jnp
from jax.experimental import pallas as pl
from jax.experimental.pallas import tpu as pltpu


_LANE = 128
_NEG_BIG = 1e30


def _round_up(x, m):
    return ((x + m - 1) // m) * m


def _pick_vmem_limit():
    """~100 MiB on 128-MiB-VMEM chips (v5e/v6e), ~48 MiB on v7x (64 MiB)."""
    try:
        cap = int(pltpu.get_tpu_info().vmem_capacity_bytes)
    except Exception:
        cap = 64 * 1024 * 1024
    return max(32 * 1024 * 1024, min(cap - 16 * 1024 * 1024, 100 * 1024 * 1024))


def _gat_layer_kernel(adst_ref, asrc_ref, adj_ref, z_ref, b_ref, out_ref,
                      m_sc, l_sc, acc_sc, *, apply_relu, approx_recip):
    """One GATConv (heads=1, negative_slope=0.2, no self loops), one
    (dst-tile, src-tile) grid step of the dense-masked online softmax.

    adst_ref : [td, 1]   f32   a_dst coefficient of each dst node in the tile
    asrc_ref : [1, ts]   f32   a_src coefficient of each src node in the tile
    adj_ref  : [td, ts]  int8  adjacency mask block (adj[dst, src])
    z_ref    : [ts, Cp]  bf16  projected source features (h @ W), padded
    b_ref    : [1, Cp]   f32   bias (zero padded)
    out_ref  : [td, Cp]  f32
    m_sc, l_sc : [td, 1] f32 scratch, acc_sc : [td, Cp] f32 scratch
    """
    j = pl.program_id(1)

    @pl.when(j == 0)
    def _():
        m_sc[...] = jnp.full_like(m_sc, -_NEG_BIG)
        l_sc[...] = jnp.zeros_like(l_sc)
        acc_sc[...] = jnp.zeros_like(acc_sc)

    mask = adj_ref[...] != 0                                  # [td, ts] bool
    e = adst_ref[...] + asrc_ref[...]                         # [td, ts] f32
    e = jnp.where(e >= 0.0, e, 0.2 * e)                       # LeakyReLU(0.2)
    e = jnp.where(mask, e, -_NEG_BIG)                         # edge mask

    m_prev = m_sc[...]
    m_new = jnp.maximum(m_prev, jnp.max(e, axis=-1, keepdims=True))
    alpha = jnp.exp(m_prev - m_new)
    # TODO(synk): on v6e/v7x a bf16 exp path (~2x EUP throughput) stays within
    # the accepted tolerance; kept f32 here since v5e has no bf16 EUP.
    p = jnp.where(mask, jnp.exp(e - m_new), 0.0)              # [td, ts] f32

    l_sc[...] = alpha * l_sc[...] + jnp.sum(p, axis=-1, keepdims=True)
    acc_sc[...] = alpha * acc_sc[...] + jnp.dot(
        p.astype(jnp.bfloat16), z_ref[...],
        preferred_element_type=jnp.float32)                   # [td, Cp]
    m_sc[...] = m_new

    @pl.when(j == pl.num_programs(1) - 1)
    def _():
        l = l_sc[...]
        inv = pl.reciprocal(jnp.where(l > 0.0, l, 1.0), approx=approx_recip)
        out = acc_sc[...] * inv + b_ref[...]
        if apply_relu:
            out = jnp.maximum(out, 0.0)                       # fused .relu()
        out_ref[...] = out


def _gat_layer(adst, asrc, adj, z, b, *, tile, apply_relu, approx_recip,
               vmem_limit):
    np_, cp = z.shape
    assert np_ % tile == 0 and tile % _LANE == 0
    grid = (np_ // tile, np_ // tile)

    n2 = np_ * np_
    cost = pl.CostEstimate(
        flops=int(2 * n2 * cp + 12 * n2 + 4 * np_ * cp),
        transcendentals=int(n2 + np_ * grid[1]),
        bytes_accessed=int(n2                              # int8 adjacency
                           + grid[0] * np_ * cp * 2        # z per dst tile
                           + np_ * cp * 4                  # output
                           + grid[1] * np_ * 4 + np_ * 4 + cp * 4),
    )

    kernel = functools.partial(_gat_layer_kernel, apply_relu=apply_relu,
                               approx_recip=approx_recip)
    return pl.pallas_call(
        kernel,
        out_shape=jax.ShapeDtypeStruct((np_, cp), jnp.float32),
        grid=grid,
        in_specs=[
            pl.BlockSpec((tile, 1), lambda i, j: (i, 0)),     # a_dst column
            pl.BlockSpec((1, tile), lambda i, j: (0, j)),     # a_src row
            pl.BlockSpec((tile, tile), lambda i, j: (i, j)),  # int8 adj block
            pl.BlockSpec((tile, cp), lambda i, j: (j, 0)),    # z src tile
            pl.BlockSpec((1, cp), lambda i, j: (0, 0)),       # bias
        ],
        out_specs=pl.BlockSpec((tile, cp), lambda i, j: (i, 0)),
        scratch_shapes=[
            pltpu.VMEM((tile, 1), jnp.float32),               # running max
            pltpu.VMEM((tile, 1), jnp.float32),               # running denom
            pltpu.VMEM((tile, cp), jnp.float32),              # accumulator
        ],
        compiler_params=pltpu.CompilerParams(
            dimension_semantics=("parallel", "arbitrary"),
            vmem_limit_bytes=int(vmem_limit),
        ),
        cost_estimate=cost,
    )(adst, asrc, adj, z, b)


def _prep_layer(h, w, a_src, a_dst, b, np_, cp):
    """Per-layer host/XLA prep: project once, fold attention vectors, pad."""
    rows, _ = h.shape
    c = w.shape[1]
    z = h @ w                                                # [rows, c] f32
    adst = z @ a_dst[0]                                      # [rows]
    asrc = z @ a_src[0]                                      # [rows]
    zp = (jnp.zeros((np_, cp), jnp.bfloat16)
          .at[:rows, :c].set(z.astype(jnp.bfloat16)))
    adst_p = jnp.zeros((np_, 1), jnp.float32).at[:rows, 0].set(adst)
    asrc_p = jnp.zeros((1, np_), jnp.float32).at[0, :rows].set(asrc)
    bp = jnp.zeros((1, cp), jnp.float32).at[:, :c].set(b)
    return adst_p, asrc_p, zp, bp


def gat3_forward(x, edge_index, params, *, tile_dst=256):
    """x: [N, F_in] f32, edge_index: [2, E] int32 (row 0 = src, row 1 = dst)."""
    n, _ = x.shape
    hid = params["w1"].shape[1]
    out_c = params["w2"].shape[1]

    hp = _round_up(hid, _LANE)
    op = _round_up(out_c, _LANE)
    tile = min(tile_dst, _round_up(n, _LANE))
    assert tile % _LANE == 0
    np_ = _round_up(n, tile)

    # Host-side glue: densify the edge list into an int8 mask (padded rows /
    # cols stay zero, so padded nodes never contribute).
    # TODO(synk): for genuinely large sparse graphs replace the dense O(N^2)
    # adjacency with CSR offsets/indices via PrefetchScalarGridSpec scalar
    # prefetch and per-dst-tile gathers of source rows.
    adj = (jnp.zeros((np_, np_), jnp.int8)
           .at[edge_index[1], edge_index[0]].set(1))

    vlim = _pick_vmem_limit()

    adst1, asrc1, z1, b1p = _prep_layer(
        x, params["w1"], params["a_src1"], params["a_dst1"], params["b1"],
        np_, hp)
    h1 = _gat_layer(adst1, asrc1, adj, z1, b1p, tile=tile,
                    apply_relu=True, approx_recip=True, vmem_limit=vlim)

    adst2, asrc2, z2, b2p = _prep_layer(
        h1[:, :hid], params["w2"], params["a_src2"], params["a_dst2"],
        params["b2"], np_, op)
    h2 = _gat_layer(adst2, asrc2, adj, z2, b2p, tile=tile,
                    apply_relu=False, approx_recip=False, vmem_limit=vlim)
    return h2[:n, :out_c]


def gat3_reference(x, edge_index, params):
    """Pure-JAX f32 reference with the same dense-masked-softmax semantics."""
    n = x.shape[0]
    adj = jnp.zeros((n, n), jnp.float32).at[edge_index[1], edge_index[0]].set(1.0)

    def layer(h, w, a_src, a_dst, b):
        z = h @ w
        e = (z @ a_dst[0])[:, None] + (z @ a_src[0])[None, :]
        e = jnp.where(e >= 0.0, e, 0.2 * e)
        e = jnp.where(adj > 0.0, e, -_NEG_BIG)
        m = jnp.max(e, axis=-1, keepdims=True)
        p = jnp.exp(e - m) * adj
        s = jnp.sum(p, axis=-1, keepdims=True)
        attn = p / jnp.where(s > 0.0, s, 1.0)
        return attn @ z + b

    h1 = jnp.maximum(layer(x, params["w1"], params["a_src1"],
                           params["a_dst1"], params["b1"]), 0.0)
    return layer(h1, params["w2"], params["a_src2"], params["a_dst2"],
                 params["b2"])


def init_params(key, in_c, hid_c, out_c):
    ks = jax.random.split(key, 8)
    s1 = 1.0 / jnp.sqrt(jnp.float32(in_c))
    s2 = 1.0 / jnp.sqrt(jnp.float32(hid_c))
    s3 = 1.0 / jnp.sqrt(jnp.float32(out_c))
    return {
        # layer 1: GATConv((-1,-1), hidden) -> lin weight [in_c, hid_c], att [1, hid_c]
        "w1":     jax.random.normal(ks[0], (in_c, hid_c), jnp.float32) * s1,
        "a_src1": jax.random.normal(ks[1], (1, hid_c), jnp.float32) * s2,
        "a_dst1": jax.random.normal(ks[2], (1, hid_c), jnp.float32) * s2,
        "b1":     jax.random.normal(ks[3], (1, hid_c), jnp.float32) * 0.1,
        # layer 2: GATConv(hidden, out)
        "w2":     jax.random.normal(ks[4], (hid_c, out_c), jnp.float32) * s2,
        "a_src2": jax.random.normal(ks[5], (1, out_c), jnp.float32) * s3,
        "a_dst2": jax.random.normal(ks[6], (1, out_c), jnp.float32) * s3,
        "b2":     jax.random.normal(ks[7], (1, out_c), jnp.float32) * 0.1,
    }


def _run_case(key, n, f_in, hid, out_c, e, tile):
    k_x, k_e, k_p = jax.random.split(key, 3)
    x = jax.random.normal(k_x, (n, f_in), jnp.float32)
    # e unique directed edges, no self-loop handling needed (add_self_loops=False)
    flat = jax.random.choice(k_e, n * n, (e,), replace=False)
    edge_index = jnp.stack([flat // n, flat % n]).astype(jnp.int32)  # (src, dst)
    params = init_params(k_p, f_in, hid, out_c)

    out = gat3_forward(x, edge_index, params, tile_dst=tile)
    out = jax.block_until_ready(out)

    ref = gat3_reference(x, edge_index, params)
    assert out.shape == (n, out_c)
    err = float(jnp.max(jnp.abs(out - ref)))
    # bf16 z / bf16 p aggregation matmuls + approx reciprocal -> loose tolerance
    assert jnp.allclose(out, ref, atol=5e-2, rtol=5e-2), f"max_abs_err={err}"
    return err


if __name__ == "__main__":
    key = jax.random.PRNGKey(0)
    k1, k2, k3 = jax.random.split(key, 3)

    # small config (single (1,1) grid step)
    _run_case(k1, n=16, f_in=32, hid=32, out_c=16, e=40, tile=128)
    # multi-tile config: N padded to 384 -> 3x3 grid, online softmax over 3 src tiles
    _run_case(k2, n=300, f_in=48, hid=64, out_c=32, e=2400, tile=128)
    # default tile=256 path: N padded to 512 -> 2x2 grid
    _run_case(k3, n=300, f_in=48, hid=64, out_c=32, e=2400, tile=256)

    print("KERNEL_OK")
</pallas_src>

<mosaic_0001>
module attributes {stable_mosaic.version = 11 : i64} {
  func.func @_gat_layer_kernel(%arg0: i32, %arg1: i32, %arg2: memref<128x1xf32, #tpu.memory_space<vmem>>, %arg3: memref<1x128xf32, #tpu.memory_space<vmem>>, %arg4: memref<128x128xi8, #tpu.memory_space<vmem>>, %arg5: memref<128x128xbf16, #tpu.memory_space<vmem>>, %arg6: memref<1x128xf32, #tpu.memory_space<vmem>>, %arg7: memref<128x128xf32, #tpu.memory_space<vmem>>, %arg8: memref<128x1xf32, #tpu.memory_space<vmem>>, %arg9: memref<128x1xf32, #tpu.memory_space<vmem>>, %arg10: memref<128x128xf32, #tpu.memory_space<vmem>>) attributes {dimension_semantics = [#tpu.dimension_semantics<parallel>, #tpu.dimension_semantics<arbitrary>], iteration_bounds = array<i64: 1, 1>, scalar_prefetch = 0 : i64, scratch_operands = 3 : i64, tpu.core_type = #tpu.core_type<tc>, window_params = [{transform_indices = @transform_0, window_bounds = array<i64: 128, 1>}, {transform_indices = @transform_1, window_bounds = array<i64: 1, 128>}, {transform_indices = @transform_2, window_bounds = array<i64: 128, 128>}, {transform_indices = @transform_3, window_bounds = array<i64: 128, 128>}, {pipeline_mode = #tpu.pipeline_mode<synchronous>, transform_indices = @transform_4, window_bounds = array<i64: 1, 128>}, {transform_indices = @transform_5, window_bounds = array<i64: 128, 128>}]} {
    %c0_i32 = arith.constant 0 : i32
    %0 = arith.cmpi eq, %arg1, %c0_i32 : i32
    %1 = arith.extui %0 : i1 to i32
    %c0_i32_0 = arith.constant 0 : i32
    %2 = arith.cmpi ne, %1, %c0_i32_0 : i32
    scf.if %2 {
      %cst_28 = arith.constant -1.000000e+30 : f32
      %47 = vector.broadcast %cst_28 : f32 to vector<128x1xf32>
      %c0_29 = arith.constant 0 : index
      %c0_30 = arith.constant 0 : index
      %48 = vector.load %arg8[%c0_29, %c0_30] : memref<128x1xf32, #tpu.memory_space<vmem>>, vector<128x1xf32>
      tpu.vector_store %arg8[%c0_29, %c0_30], %47 {strides = array<i32>} : memref<128x1xf32, #tpu.memory_space<vmem>>, vector<128x1xf32>,
      %cst_31 = arith.constant 0.000000e+00 : f32
      %49 = vector.broadcast %cst_31 : f32 to vector<128x1xf32>
      %c0_32 = arith.constant 0 : index
      %c0_33 = arith.constant 0 : index
      %50 = vector.load %arg9[%c0_32, %c0_33] : memref<128x1xf32, #tpu.memory_space<vmem>>, vector<128x1xf32>
      tpu.vector_store %arg9[%c0_32, %c0_33], %49 {strides = array<i32>} : memref<128x1xf32, #tpu.memory_space<vmem>>, vector<128x1xf32>,
      %cst_34 = arith.constant 0.000000e+00 : f32
      %51 = vector.broadcast %cst_34 : f32 to vector<128x128xf32>
      %c0_35 = arith.constant 0 : index
      %c0_36 = arith.constant 0 : index
      %52 = vector.load %arg10[%c0_35, %c0_36] : memref<128x128xf32, #tpu.memory_space<vmem>>, vector<128x128xf32>
      tpu.vector_store %arg10[%c0_35, %c0_36], %51 {strides = array<i32>} : memref<128x128xf32, #tpu.memory_space<vmem>>, vector<128x128xf32>,
    } else {
    }
    %c0 = arith.constant 0 : index
    %c0_1 = arith.constant 0 : index
    %3 = vector.load %arg4[%c0, %c0_1] : memref<128x128xi8, #tpu.memory_space<vmem>>, vector<128x128xi8>
    %c0_i8 = arith.constant 0 : i8
    %4 = vector.broadcast %c0_i8 : i8 to vector<128x128xi8>
    %5 = arith.cmpi ne, %3, %4 : vector<128x128xi8>
    %c0_2 = arith.constant 0 : index
    %c0_3 = arith.constant 0 : index
    %6 = vector.load %arg2[%c0_2, %c0_3] : memref<128x1xf32, #tpu.memory_space<vmem>>, vector<128x1xf32>
    %c0_4 = arith.constant 0 : index
    %c0_5 = arith.constant 0 : index
    %7 = vector.load %arg3[%c0_4, %c0_5] : memref<1x128xf32, #tpu.memory_space<vmem>>, vector<1x128xf32>
    %8 = vector.broadcast %6 : vector<128x1xf32> to vector<128x128xf32>
    %9 = vector.broadcast %7 : vector<1x128xf32> to vector<128x128xf32>
    %10 = arith.addf %8, %9 : vector<128x128xf32>
    %cst = arith.constant 0.000000e+00 : f32
    %11 = vector.broadcast %cst : f32 to vector<128x128xf32>
    %12 = arith.cmpf oge, %10, %11 : vector<128x128xf32>
    %cst_6 = arith.constant 2.000000e-01 : f32
    %13 = vector.broadcast %cst_6 : f32 to vector<128x128xf32>
    %14 = arith.mulf %13, %10 : vector<128x128xf32>
    %15 = arith.select %12, %10, %14 : vector<128x128xi1>, vector<128x128xf32>
    %cst_7 = arith.constant -1.000000e+30 : f32
    %16 = vector.broadcast %cst_7 : f32 to vector<128x128xf32>
    %17 = arith.select %5, %15, %16 : vector<128x128xi1>, vector<128x128xf32>
    %c0_8 = arith.constant 0 : index
    %c0_9 = arith.constant 0 : index
    %18 = vector.load %arg8[%c0_8, %c0_9] : memref<128x1xf32, #tpu.memory_space<vmem>>, vector<128x1xf32>
    %cst_10 = arith.constant dense<0xFF800000> : vector<128xf32>
    %19 = vector.multi_reduction <maximumf>, %17, %cst_10 [1] : vector<128x128xf32> to vector<128xf32>
    %20 = vector.shape_cast %19 : vector<128xf32> to vector<128x1xf32>
    %21 = arith.maximumf %18, %20 : vector<128x1xf32>
    %22 = arith.subf %18, %21 : vector<128x1xf32>
    %23 = math.exp %22 : vector<128x1xf32>
    %24 = vector.broadcast %21 : vector<128x1xf32> to vector<128x128xf32>
    %25 = arith.subf %17, %24 : vector<128x128xf32>
    %26 = math.exp %25 : vector<128x128xf32>
    %cst_11 = arith.constant 0.000000e+00 : f32
    %27 = vector.broadcast %cst_11 : f32 to vector<128x128xf32>
    %28 = arith.select %5, %26, %27 : vector<128x128xi1>, vector<128x128xf32>
    %c0_12 = arith.constant 0 : index
    %c0_13 = arith.constant 0 : index
    %29 = vector.load %arg9[%c0_12, %c0_13] : memref<128x1xf32, #tpu.memory_space<vmem>>, vector<128x1xf32>
    %30 = arith.mulf %23, %29 : vector<128x1xf32>
    %cst_14 = arith.constant dense<0.000000e+00> : vector<128xf32>
    %31 = vector.multi_reduction <add>, %28, %cst_14 [1] : vector<128x128xf32> to vector<128xf32>
    %32 = vector.shape_cast %31 : vector<128xf32> to vector<128x1xf32>
    %33 = arith.addf %30, %32 : vector<128x1xf32>
    %c0_15 = arith.constant 0 : index
    %c0_16 = arith.constant 0 : index
    %34 = vector.load %arg9[%c0_15, %c0_16] : memref<128x1xf32, #tpu.memory_space<vmem>>, vector<128x1xf32>
    tpu.vector_store %arg9[%c0_15, %c0_16], %33 {strides = array<i32>} : memref<128x1xf32, #tpu.memory_space<vmem>>, vector<128x1xf32>,
    %c0_17 = arith.constant 0 : index
    %c0_18 = arith.constant 0 : index
    %35 = vector.load %arg10[%c0_17, %c0_18] : memref<128x128xf32, #tpu.memory_space<vmem>>, vector<128x128xf32>
    %36 = vector.broadcast %23 : vector<128x1xf32> to vector<128x128xf32>
    %37 = arith.mulf %36, %35 : vector<128x128xf32>
    %38 = arith.truncf %28 : vector<128x128xf32> to vector<128x128xbf16>
    %c0_19 = arith.constant 0 : index
    %c0_20 = arith.constant 0 : index
    %39 = vector.load %arg5[%c0_19, %c0_20] : memref<128x128xbf16, #tpu.memory_space<vmem>>, vector<128x128xbf16>
    %cst_21 = arith.constant dense<0.000000e+00> : vector<128x128xf32>
    %40 = tpu.matmul %38, %39, %cst_21 {dimension_numbers = #tpu.dot_dimension_numbers<[1], [0], [0], [1], [0, 0, 1, 1], [], []>} : vector<128x128xbf16>, vector<128x128xbf16>, vector<128x128xf32> -> vector<128x128xf32>
    %41 = arith.addf %37, %40 : vector<128x128xf32>
    %c0_22 = arith.constant 0 : index
    %c0_23 = arith.constant 0 : index
    %42 = vector.load %arg10[%c0_22, %c0_23] : memref<128x128xf32, #tpu.memory_space<vmem>>, vector<128x128xf32>
    tpu.vector_store %arg10[%c0_22, %c0_23], %41 {strides = array<i32>} : memref<128x128xf32, #tpu.memory_space<vmem>>, vector<128x128xf32>,
    %c0_24 = arith.constant 0 : index
    %c0_25 = arith.constant 0 : index
    %43 = vector.load %arg8[%c0_24, %c0_25] : memref<128x1xf32, #tpu.memory_space<vmem>>, vector<128x1xf32>
    tpu.vector_store %arg8[%c0_24, %c0_25], %21 {strides = array<i32>} : memref<128x1xf32, #tpu.memory_space<vmem>>, vector<128x1xf32>,
    %c0_i32_26 = arith.constant 0 : i32
    %44 = arith.cmpi eq, %arg1, %c0_i32_26 : i32
    %45 = arith.extui %44 : i1 to i32
    %c0_i32_27 = arith.constant 0 : i32
    %46 = arith.cmpi ne, %45, %c0_i32_27 : i32
    scf.if %46 {
      %c0_28 = arith.constant 0 : index
      %c0_29 = arith.constant 0 : index
      %47 = vector.load %arg9[%c0_28, %c0_29] : memref<128x1xf32, #tpu.memory_space<vmem>>, vector<128x1xf32>
      %cst_30 = arith.constant 0.000000e+00 : f32
      %48 = vector.broadcast %cst_30 : f32 to vector<128x1xf32>
      %49 = arith.cmpf ogt, %47, %48 : vector<128x1xf32>
      %cst_31 = arith.constant 1.000000e+00 : f32
      %50 = vector.broadcast %cst_31 : f32 to vector<128x1xf32>
      %51 = arith.select %49, %47, %50 : vector<128x1xi1>, vector<128x1xf32>
      %52 = tpu.reciprocal %51 {approx = true} : vector<128x1xf32> -> vector<128x1xf32>
      %c0_32 = arith.constant 0 : index
      %c0_33 = arith.constant 0 : index
      %53 = vector.load %arg10[%c0_32, %c0_33] : memref<128x128xf32, #tpu.memory_space<vmem>>, vector<128x128xf32>
      %54 = vector.broadcast %52 : vector<128x1xf32> to vector<128x128xf32>
      %55 = arith.mulf %53, %54 : vector<128x128xf32>
      %c0_34 = arith.constant 0 : index
      %c0_35 = arith.constant 0 : index
      %56 = vector.load %arg6[%c0_34, %c0_35] : memref<1x128xf32, #tpu.memory_space<vmem>>, vector<1x128xf32>
      %57 = vector.broadcast %56 : vector<1x128xf32> to vector<128x128xf32>
      %58 = arith.addf %55, %57 : vector<128x128xf32>
      %cst_36 = arith.constant 0.000000e+00 : f32
      %59 = vector.broadcast %cst_36 : f32 to vector<128x128xf32>
      %60 = arith.maximumf %58, %59 : vector<128x128xf32>
      %c0_37 = arith.constant 0 : index
      %c0_38 = arith.constant 0 : index
      %61 = vector.load %arg7[%c0_37, %c0_38] : memref<128x128xf32, #tpu.memory_space<vmem>>, vector<128x128xf32>
      tpu.vector_store %arg7[%c0_37, %c0_38], %60 {strides = array<i32>} : memref<128x128xf32, #tpu.memory_space<vmem>>, vector<128x128xf32>,
    } else {
    }
    return
  }
  func.func @transform_0(%arg0: i32, %arg1: i32) -> (i32, i32) {
    %c0_i32 = arith.constant 0 : i32
    %c0_i32_0 = arith.constant 0 : i32
    return %arg0, %c0_i32 : i32, i32
  }
  func.func @transform_1(%arg0: i32, %arg1: i32) -> (i32, i32) {
    %c0_i32 = arith.constant 0 : i32
    %c0_i32_0 = arith.constant 0 : i32
    return %c0_i32, %arg1 : i32, i32
  }
  func.func @transform_2(%arg0: i32, %arg1: i32) -> (i32, i32) {
    %c0_i32 = arith.constant 0 : i32
    return %arg0, %arg1 : i32, i32
  }
  func.func @transform_3(%arg0: i32, %arg1: i32) -> (i32, i32) {
    %c0_i32 = arith.constant 0 : i32
    %c0_i32_0 = arith.constant 0 : i32
    return %arg1, %c0_i32 : i32, i32
  }
  func.func @transform_4(%arg0: i32, %arg1: i32) -> (i32, i32) {
    %c0_i32 = arith.constant 0 : i32
    %c0_i32_0 = arith.constant 0 : i32
    %c0_i32_1 = arith.constant 0 : i32
    return %c0_i32, %c0_i32_0 : i32, i32
  }
  func.func @transform_5(%arg0: i32, %arg1: i32) -> (i32, i32) {
    %c0_i32 = arith.constant 0 : i32
    %c0_i32_0 = arith.constant 0 : i32
    return %arg0, %c0_i32 : i32, i32
  }
}

</mosaic_0001>

<llo_original>
// kernel: tpu_custom_call.1
$region0: #{tpu_custom_call.1}
  #allocation0 [shape = 'u32[]', space=smem, size = 0x4, offset = 0x4, fixed_abs, tag = 'smem constant byte address 0x4 - core index']
  #allocation1 [shape = 'u32[72,128]{1,0:T(1,128)}', space=vmem, size = 0x9000, scoped, tag = 'internal scratch']
  #allocation2 [shape = 'f32[128,1]{1,0:T(8,128)}', space=vmem, size = 0x10000, scoped, tag = 'scratch operand']
  #allocation3 [shape = 'f32[128,1]{1,0:T(8,128)}', space=vmem, size = 0x10000, scoped, tag = 'scratch operand']
  #allocation4 [shape = 'f32[128,128]{1,0:T(8,128)}', space=vmem, size = 0x10000, scoped, tag = 'scratch operand']
  %s0 = inlined_call_operand.vmem [shape: f32[128,1], index: 0, kind: input, shape index: {}]
  %s1 = inlined_call_operand.vmem [shape: f32[1,128], index: 1, kind: input, shape index: {}]
  %s2 = inlined_call_operand.vmem [shape: s8[128,128], index: 2, kind: input, shape index: {}]
  %s3 = inlined_call_operand.vmem [shape: bf16[128,128], index: 3, kind: input, shape index: {}]
  %s4 = inlined_call_operand.vmem [shape: f32[1,128], index: 4, kind: input, shape index: {}]
  %s5 = inlined_call_operand.hbm [shape: f32[128,128], index: 5, kind: output, shape index: {}]
  %s6 = sld [smem:[#allocation0]]
  $region38: #{tpu_custom_call.1} parent=0
    _
  %s8 = ssub.s32 1, %s6
  %s9 = scalar_select 0, %s8, %s6
  $region1: #{tpu_custom_call.1} parent=0
    #allocation5 [shape = 'u8[65536]{0}', space=vmem, size = 0x10000, scoped, tag = 'output window, operand 0, single buffered']
    #allocation6 [shape = 's32[1]{0}', space=sflag, size = 0x4, scoped, tag = 'scoped memory for tpu_custom_call.1']
    %10 = vsyncpa [#allocation6], 0
    // Predicated region
    $region2: #{tpu_custom_call.1} parent=1 // pred_check
      _
    $region3: #{tpu_custom_call.1} parent=1 // pred_check_branch
      %12 = sbr.rel (0) target = $region5
    $region4: #{tpu_custom_call.1} parent=1 // pred_region
      _
    $region5: #{tpu_custom_call.1} parent=1 // pred_fallthru
      _
    // Predicated region
    $region6: #{tpu_custom_call.1} parent=1 // pred_check
      _
    $region7: #{tpu_custom_call.1} parent=1 // pred_check_branch
      %14 = sbr.rel (0) target = $region9
    $region8: #{tpu_custom_call.1} parent=1 // pred_region
      _
    $region9: #{tpu_custom_call.1} parent=1 // pred_fallthru
      _
    // Predicated region
    $region10: #{tpu_custom_call.1} parent=1 // pred_check
      _
    $region11: #{tpu_custom_call.1} parent=1 // pred_check_branch
      %16 = sbr.rel (0) target = $region13
    $region12: #{tpu_custom_call.1} parent=1 // pred_region
      _
    $region13: #{tpu_custom_call.1} parent=1 // pred_fallthru
      _
    // Predicated region
    $region14: #{tpu_custom_call.1} parent=1 // pred_check
      _
    $region15: #{tpu_custom_call.1} parent=1 // pred_check_branch
      %18 = sbr.rel (0) target = $region17
    $region16: #{tpu_custom_call.1} parent=1 // pred_region
      _
    $region17: #{tpu_custom_call.1} parent=1 // pred_fallthru
      _
    // Predicated region
    $region18: #{tpu_custom_call.1} parent=1 // pred_check
      _
    $region19: #{tpu_custom_call.1} parent=1 // pred_check_branch
      %20 = sbr.rel (0) target = $region21
    $region20: #{tpu_custom_call.1} parent=1 // pred_region
      _
    $region21: #{tpu_custom_call.1} parent=1 // pred_fallthru
      _
    %p23 = scmp.eq.s32.totalorder 0, 0
    // Predicated region
    $region22: #{tpu_custom_call.1} parent=1 // pred_check
      %p24 = pneg %p23
    $region23: #{tpu_custom_call.1} parent=1 // pred_check_branch
      %26 = sbr.rel (%p24) target = $region25
    $region24: #{tpu_custom_call.1} parent=1 // pred_region
      %vm27 = vcmask 7168
      %28 = vst.msk [vmem:[#allocation2] sm:$0xff] %vm27, -1e+30
      %29 = vst.msk [vmem:[#allocation2 + $0x8] sm:$0xff] %vm27, -1e+30
      %30 = vst.msk [vmem:[#allocation2 + $0x10] sm:$0xff] %vm27, -1e+30
      %31 = vst.msk [vmem:[#allocation2 + $0x18] sm:$0xff] %vm27, -1e+30
      %32 = vst.msk [vmem:[#allocation2 + $0x20] sm:$0xff] %vm27, -1e+30
      %33 = vst.msk [vmem:[#allocation2 + $0x28] sm:$0xff] %vm27, -1e+30
      %34 = vst.msk [vmem:[#allocation2 + $0x30] sm:$0xff] %vm27, -1e+30
      %35 = vst.msk [vmem:[#allocation2 + $0x38] sm:$0xff] %vm27, -1e+30
      %36 = vst.msk [vmem:[#allocation2 + $0x40] sm:$0xff] %vm27, -1e+30
      %37 = vst.msk [vmem:[#allocation2 + $0x48] sm:$0xff] %vm27, -1e+30
      %38 = vst.msk [vmem:[#allocation2 + $0x50] sm:$0xff] %vm27, -1e+30
      %39 = vst.msk [vmem:[#allocation2 + $0x58] sm:$0xff] %vm27, -1e+30
      %40 = vst.msk [vmem:[#allocation2 + $0x60] sm:$0xff] %vm27, -1e+30
      %41 = vst.msk [vmem:[#allocation2 + $0x68] sm:$0xff] %vm27, -1e+30
      %42 = vst.msk [vmem:[#allocation2 + $0x70] sm:$0xff] %vm27, -1e+30
      %43 = vst.msk [vmem:[#allocation2 + $0x78] sm:$0xff] %vm27, -1e+30
      %44 = vst.msk [vmem:[#allocation3] sm:$0xff] %vm27, 0.0
      %45 = vst.msk [vmem:[#allocation3 + $0x8] sm:$0xff] %vm27, 0.0
      %46 = vst.msk [vmem:[#allocation3 + $0x10] sm:$0xff] %vm27, 0.0
      %47 = vst.msk [vmem:[#allocation3 + $0x18] sm:$0xff] %vm27, 0.0
      %48 = vst.msk [vmem:[#allocation3 + $0x20] sm:$0xff] %vm27, 0.0
      %49 = vst.msk [vmem:[#allocation3 + $0x28] sm:$0xff] %vm27, 0.0
      %50 = vst.msk [vmem:[#allocation3 + $0x30] sm:$0xff] %vm27, 0.0
      %51 = vst.msk [vmem:[#allocation3 + $0x38] sm:$0xff] %vm27, 0.0
      %52 = vst.msk [vmem:[#allocation3 + $0x40] sm:$0xff] %vm27, 0.0
      %53 = vst.msk [vmem:[#allocation3 + $0x48] sm:$0xff] %vm27, 0.0
      %54 = vst.msk [vmem:[#allocation3 + $0x50] sm:$0xff] %vm27, 0.0
      %55 = vst.msk [vmem:[#allocation3 + $0x58] sm:$0xff] %vm27, 0.0
      %56 = vst.msk [vmem:[#allocation3 + $0x60] sm:$0xff] %vm27, 0.0
      %57 = vst.msk [vmem:[#allocation3 + $0x68] sm:$0xff] %vm27, 0.0
      %58 = vst.msk [vmem:[#allocation3 + $0x70] sm:$0xff] %vm27, 0.0
      %59 = vst.msk [vmem:[#allocation3 + $0x78] sm:$0xff] %vm27, 0.0
      %60 = vst [vmem:[#allocation4] sm:$0xff] 0.0
      %61 = vst [vmem:[#allocation4 + $0x8] sm:$0xff] 0.0
      %62 = vst [vmem:[#allocation4 + $0x10] sm:$0xff] 0.0
      %63 = vst [vmem:[#allocation4 + $0x18] sm:$0xff] 0.0
      %64 = vst [vmem:[#allocation4 + $0x20] sm:$0xff] 0.0
      %65 = vst [vmem:[#allocation4 + $0x28] sm:$0xff] 0.0
      %66 = vst [vmem:[#allocation4 + $0x30] sm:$0xff] 0.0
      %67 = vst [vmem:[#allocation4 + $0x38] sm:$0xff] 0.0
      %68 = vst [vmem:[#allocation4 + $0x40] sm:$0xff] 0.0
      %69 = vst [vmem:[#allocation4 + $0x48] sm:$0xff] 0.0
      %70 = vst [vmem:[#allocation4 + $0x50] sm:$0xff] 0.0
      %71 = vst [vmem:[#allocation4 + $0x58] sm:$0xff] 0.0
      %72 = vst [vmem:[#allocation4 + $0x60] sm:$0xff] 0.0
      %73 = vst [vmem:[#allocation4 + $0x68] sm:$0xff] 0.0
      %74 = vst [vmem:[#allocation4 + $0x70] sm:$0xff] 0.0
      %75 = vst [vmem:[#allocation4 + $0x78] sm:$0xff] 0.0
    $region25: #{tpu_custom_call.1} parent=1 // pred_fallthru
      _
    %v76 = vld [vmem:[%s2] sm:$0xff]
    %v77 = vld [vmem:[%s2 + $0x8] sm:$0xff]
    %v78 = vld [vmem:[%s2 + $0x10] sm:$0xff]
    %v79 = vld [vmem:[%s2 + $0x18] sm:$0xff]
    %vm80 = vnez %v76
    %vm81 = vnez %v77
    %vm82 = vnez %v78
    %vm83 = vnez %v79
    %v84 = vld [vmem:[%s0] sm:$0xff]
    %v85 = vld [vmem:[%s0 + $0x8] sm:$0xff]
    %v86 = vld [vmem:[%s0 + $0x10] sm:$0xff]
    %v87 = vld [vmem:[%s0 + $0x18] sm:$0xff]
    %v88 = vld [vmem:[%s0 + $0x20] sm:$0xff]
    %v89 = vld [vmem:[%s0 + $0x28] sm:$0xff]
    %v90 = vld [vmem:[%s0 + $0x30] sm:$0xff]
    %v91 = vld [vmem:[%s0 + $0x38] sm:$0xff]
    %v92 = vld [vmem:[%s0 + $0x40] sm:$0xff]
    %v93 = vld [vmem:[%s0 + $0x48] sm:$0xff]
    %v94 = vld [vmem:[%s0 + $0x50] sm:$0xff]
    %v95 = vld [vmem:[%s0 + $0x58] sm:$0xff]
    %v96 = vld [vmem:[%s0 + $0x60] sm:$0xff]
    %v97 = vld [vmem:[%s0 + $0x68] sm:$0xff]
    %v98 = vld [vmem:[%s0 + $0x70] sm:$0xff]
    %v99 = vld [vmem:[%s0 + $0x78] sm:$0xff]
    %v100 = vld [vmem:[%s1] sm:$0x1]
    %102 = vset.pattern.permute.xlu0 0
    %103 = vperm.xlu0 %102, %v84
    %v104 = vpop.permute.xlu0 %103
    %107 = vset.pattern.permute.xlu0 0
    %108 = vperm.xlu0 %107, %v85
    %v109 = vpop.permute.xlu0 %108
    %112 = vset.pattern.permute.xlu0 0
    %113 = vperm.xlu0 %112, %v86
    %v114 = vpop.permute.xlu0 %113
    %117 = vset.pattern.permute.xlu0 0
    %118 = vperm.xlu0 %117, %v87
    %v119 = vpop.permute.xlu0 %118
    %122 = vset.pattern.permute.xlu0 0
    %123 = vperm.xlu0 %122, %v88
    %v124 = vpop.permute.xlu0 %123
    %127 = vset.pattern.permute.xlu0 0
    %128 = vperm.xlu0 %127, %v89
    %v129 = vpop.permute.xlu0 %128
    %132 = vset.pattern.permute.xlu0 0
    %133 = vperm.xlu0 %132, %v90
    %v134 = vpop.permute.xlu0 %133
    %137 = vset.pattern.permute.xlu0 0
    %138 = vperm.xlu0 %137, %v91
    %v139 = vpop.permute.xlu0 %138
    %142 = vset.pattern.permute.xlu0 0
    %143 = vperm.xlu0 %142, %v92
    %v144 = vpop.permute.xlu0 %143
    %147 = vset.pattern.permute.xlu0 0
    %148 = vperm.xlu0 %147, %v93
    %v149 = vpop.permute.xlu0 %148
    %152 = vset.pattern.permute.xlu0 0
    %153 = vperm.xlu0 %152, %v94
    %v154 = vpop.permute.xlu0 %153
    %157 = vset.pattern.permute.xlu0 0
    %158 = vperm.xlu0 %157, %v95
    %v159 = vpop.permute.xlu0 %158
    %162 = vset.pattern.permute.xlu0 0
    %163 = vperm.xlu0 %162, %v96
    %v164 = vpop.permute.xlu0 %163
    %167 = vset.pattern.permute.xlu0 0
    %168 = vperm.xlu0 %167, %v97
    %v169 = vpop.permute.xlu0 %168
    %172 = vset.pattern.permute.xlu0 0
    %173 = vperm.xlu0 %172, %v98
    %v174 = vpop.permute.xlu0 %173
    %177 = vset.pattern.permute.xlu0 0
    %178 = vperm.xlu0 %177, %v99
    %v179 = vpop.permute.xlu0 %178
    %v182 = vperm.slane %v100, 0
    %v184 = vadd.f32 %v104, %v182
    %v185 = vadd.f32 %v109, %v182
    %v186 = vadd.f32 %v114, %v182
    %v187 = vadd.f32 %v119, %v182
    %v188 = vadd.f32 %v124, %v182
    %v189 = vadd.f32 %v129, %v182
    %v190 = vadd.f32 %v134, %v182
    %v191 = vadd.f32 %v139, %v182
    %v192 = vadd.f32 %v144, %v182
    %v193 = vadd.f32 %v149, %v182
    %v194 = vadd.f32 %v154, %v182
    %v195 = vadd.f32 %v159, %v182
    %v196 = vadd.f32 %v164, %v182
    %v197 = vadd.f32 %v169, %v182
    %v198 = vadd.f32 %v174, %v182
    %v199 = vadd.f32 %v179, %v182
    %vm200 = vcmp.ge.f32.partialorder %v184, 0.0
    %vm201 = vcmp.ge.f32.partialorder %v185, 0.0
    %vm202 = vcmp.ge.f32.partialorder %v186, 0.0
    %vm203 = vcmp.ge.f32.partialorder %v187, 0.0
    %vm204 = vcmp.ge.f32.partialorder %v188, 0.0
    %vm205 = vcmp.ge.f32.partialorder %v189, 0.0
    %vm206 = vcmp.ge.f32.partialorder %v190, 0.0
    %vm207 = vcmp.ge.f32.partialorder %v191, 0.0
    %vm208 = vcmp.ge.f32.partialorder %v192, 0.0
    %vm209 = vcmp.ge.f32.partialorder %v193, 0.0
    %vm210 = vcmp.ge.f32.partialorder %v194, 0.0
    %vm211 = vcmp.ge.f32.partialorder %v195, 0.0
    %vm212 = vcmp.ge.f32.partialorder %v196, 0.0
    %vm213 = vcmp.ge.f32.partialorder %v197, 0.0
    %vm214 = vcmp.ge.f32.partialorder %v198, 0.0
    %vm215 = vcmp.ge.f32.partialorder %v199, 0.0
    %v216 = vmul.f32 %v184, 0.2
    %v217 = vmul.f32 %v185, 0.2
    %v218 = vmul.f32 %v186, 0.2
    %v219 = vmul.f32 %v187, 0.2
    %v220 = vmul.f32 %v188, 0.2
    %v221 = vmul.f32 %v189, 0.2
    %v222 = vmul.f32 %v190, 0.2
    %v223 = vmul.f32 %v191, 0.2
    %v224 = vmul.f32 %v192, 0.2
    %v225 = vmul.f32 %v193, 0.2
    %v226 = vmul.f32 %v194, 0.2
    %v227 = vmul.f32 %v195, 0.2
    %v228 = vmul.f32 %v196, 0.2
    %v229 = vmul.f32 %v197, 0.2
    %v230 = vmul.f32 %v198, 0.2
    %v231 = vmul.f32 %v199, 0.2
    %v232 = vsel %vm200, %v184, %v216
    %v233 = vsel %vm201, %v185, %v217
    %v234 = vsel %vm202, %v186, %v218
    %v235 = vsel %vm203, %v187, %v219
    %v236 = vsel %vm204, %v188, %v220
    %v237 = vsel %vm205, %v189, %v221
    %v238 = vsel %vm206, %v190, %v222
    %v239 = vsel %vm207, %v191, %v223
    %v240 = vsel %vm208, %v192, %v224
    %v241 = vsel %vm209, %v193, %v225
    %v242 = vsel %vm210, %v194, %v226
    %v243 = vsel %vm211, %v195, %v227
    %v244 = vsel %vm212, %v196, %v228
    %v245 = vsel %vm213, %v197, %v229
    %v246 = vsel %vm214, %v198, %v230
    %v247 = vsel %vm215, %v199, %v231
    %v248 = vsel %vm80, 16843009, 0
    %v249 = vsel %vm81, 16843009, 0
    %v250 = vsel %vm82, 16843009, 0
    %v251 = vsel %vm83, 16843009, 0
    %v252 = vunpack.c.0.s8 %v248
    %v253 = vunpack.c.1.s8 %v248
    %v254 = vunpack.c.2.s8 %v248
    %v255 = vunpack.c.3.s8 %v248
    %v256 = vunpack.c.0.s8 %v249
    %v257 = vunpack.c.1.s8 %v249
    %v258 = vunpack.c.2.s8 %v249
    %v259 = vunpack.c.3.s8 %v249
    %v260 = vunpack.c.0.s8 %v250
    %v261 = vunpack.c.1.s8 %v250
    %v262 = vunpack.c.2.s8 %v250
    %v263 = vunpack.c.3.s8 %v250
    %v264 = vunpack.c.0.s8 %v251
    %v265 = vunpack.c.1.s8 %v251
    %v266 = vunpack.c.2.s8 %v251
    %v267 = vunpack.c.3.s8 %v251
    %v268 = vpack.c.b16 %v252, %v252
    %v269 = vpack.c.b8 %v268, %v268
    %v270 = vpack.c.b16 %v253, %v253
    %v271 = vpack.c.b8 %v270, %v270
    %v272 = vpack.c.b16 %v254, %v254
    %v273 = vpack.c.b8 %v272, %v272
    %v274 = vpack.c.b16 %v255, %v255
    %v275 = vpack.c.b8 %v274, %v274
    %v276 = vpack.c.b16 %v256, %v256
    %v277 = vpack.c.b8 %v276, %v276
    %v278 = vpack.c.b16 %v257, %v257
    %v279 = vpack.c.b8 %v278, %v278
    %v280 = vpack.c.b16 %v258, %v258
    %v281 = vpack.c.b8 %v280, %v280
    %v282 = vpack.c.b16 %v259, %v259
    %v283 = vpack.c.b8 %v282, %v282
    %v284 = vpack.c.b16 %v260, %v260
    %v285 = vpack.c.b8 %v284, %v284
    %v286 = vpack.c.b16 %v261, %v261
    %v287 = vpack.c.b8 %v286, %v286
    %v288 = vpack.c.b16 %v262, %v262
    %v289 = vpack.c.b8 %v288, %v288
    %v290 = vpack.c.b16 %v263, %v263
    %v291 = vpack.c.b8 %v290, %v290
    %v292 = vpack.c.b16 %v264, %v264
    %v293 = vpack.c.b8 %v292, %v292
    %v294 = vpack.c.b16 %v265, %v265
    %v295 = vpack.c.b8 %v294, %v294
    %v296 = vpack.c.b16 %v266, %v266
    %v297 = vpack.c.b8 %v296, %v296
    %v298 = vpack.c.b16 %v267, %v267
    %v299 = vpack.c.b8 %v298, %v298
    %vm300 = vnez %v269
    %vm301 = vnez %v271
    %vm302 = vnez %v273
    %vm303 = vnez %v275
    %vm304 = vnez %v277
    %vm305 = vnez %v279
    %vm306 = vnez %v281
    %vm307 = vnez %v283
    %vm308 = vnez %v285
    %vm309 = vnez %v287
    %vm310 = vnez %v289
    %vm311 = vnez %v291
    %vm312 = vnez %v293
    %vm313 = vnez %v295
    %vm314 = vnez %v297
    %vm315 = vnez %v299
    %v316 = vsel %vm300, 16843009, 0
    %v317 = vsel %vm301, 16843009, 0
    %v318 = vsel %vm302, 16843009, 0
    %v319 = vsel %vm303, 16843009, 0
    %v320 = vsel %vm304, 16843009, 0
    %v321 = vsel %vm305, 16843009, 0
    %v322 = vsel %vm306, 16843009, 0
    %v323 = vsel %vm307, 16843009, 0
    %v324 = vsel %vm308, 16843009, 0
    %v325 = vsel %vm309, 16843009, 0
    %v326 = vsel %vm310, 16843009, 0
    %v327 = vsel %vm311, 16843009, 0
    %v328 = vsel %vm312, 16843009, 0
    %v329 = vsel %vm313, 16843009, 0
    %v330 = vsel %vm314, 16843009, 0
    %v331 = vsel %vm315, 16843009, 0
    %v332 = vunpack.c.0.s8 %v316
    %v333 = vunpack.c.0.s8 %v317
    %v334 = vunpack.c.0.s8 %v318
    %v335 = vunpack.c.0.s8 %v319
    %v336 = vunpack.c.0.s8 %v320
    %v337 = vunpack.c.0.s8 %v321
    %v338 = vunpack.c.0.s8 %v322
    %v339 = vunpack.c.0.s8 %v323
    %v340 = vunpack.c.0.s8 %v324
    %v341 = vunpack.c.0.s8 %v325
    %v342 = vunpack.c.0.s8 %v326
    %v343 = vunpack.c.0.s8 %v327
    %v344 = vunpack.c.0.s8 %v328
    %v345 = vunpack.c.0.s8 %v329
    %v346 = vunpack.c.0.s8 %v330
    %v347 = vunpack.c.0.s8 %v331
    %vm348 = vcmp.ne.s32.totalorder %v332, 0
    %vm349 = vcmp.ne.s32.totalorder %v333, 0
    %vm350 = vcmp.ne.s32.totalorder %v334, 0
    %vm351 = vcmp.ne.s32.totalorder %v335, 0
    %vm352 = vcmp.ne.s32.totalorder %v336, 0
    %vm353 = vcmp.ne.s32.totalorder %v337, 0
    %vm354 = vcmp.ne.s32.totalorder %v338, 0
    %vm355 = vcmp.ne.s32.totalorder %v339, 0
    %vm356 = vcmp.ne.s32.totalorder %v340, 0
    %vm357 = vcmp.ne.s32.totalorder %v341, 0
    %vm358 = vcmp.ne.s32.totalorder %v342, 0
    %vm359 = vcmp.ne.s32.totalorder %v343, 0
    %vm360 = vcmp.ne.s32.totalorder %v344, 0
    %vm361 = vcmp.ne.s32.totalorder %v345, 0
    %vm362 = vcmp.ne.s32.totalorder %v346, 0
    %vm363 = vcmp.ne.s32.totalorder %v347, 0
    %v364 = vsel %vm348, %v232, -1e+30
    %v365 = vsel %vm349, %v233, -1e+30
    %v366 = vsel %vm350, %v234, -1e+30
    %v367 = vsel %vm351, %v235, -1e+30
    %v368 = vsel %vm352, %v236, -1e+30
    %v369 = vsel %vm353, %v237, -1e+30
    %v370 = vsel %vm354, %v238, -1e+30
    %v371 = vsel %vm355, %v239, -1e+30
    %v372 = vsel %vm356, %v240, -1e+30
    %v373 = vsel %vm357, %v241, -1e+30
    %v374 = vsel %vm358, %v242, -1e+30
    %v375 = vsel %vm359, %v243, -1e+30
    %v376 = vsel %vm360, %v244, -1e+30
    %v377 = vsel %vm361, %v245, -1e+30
    %v378 = vsel %vm362, %v246, -1e+30
    %v379 = vsel %vm363, %v247, -1e+30
    %v380 = vld [vmem:[#allocation2] sm:$0xff]
    %v381 = vld [vmem:[#allocation2 + $0x8] sm:$0xff]
    %v382 = vld [vmem:[#allocation2 + $0x10] sm:$0xff]
    %v383 = vld [vmem:[#allocation2 + $0x18] sm:$0xff]
    %v384 = vld [vmem:[#allocation2 + $0x20] sm:$0xff]
    %v385 = vld [vmem:[#allocation2 + $0x28] sm:$0xff]
    %v386 = vld [vmem:[#allocation2 + $0x30] sm:$0xff]
    %v387 = vld [vmem:[#allocation2 + $0x38] sm:$0xff]
    %v388 = vld [vmem:[#allocation2 + $0x40] sm:$0xff]
    %v389 = vld [vmem:[#allocation2 + $0x48] sm:$0xff]
    %v390 = vld [vmem:[#allocation2 + $0x50] sm:$0xff]
    %v391 = vld [vmem:[#allocation2 + $0x58] sm:$0xff]
    %v392 = vld [vmem:[#allocation2 + $0x60] sm:$0xff]
    %v393 = vld [vmem:[#allocation2 + $0x68] sm:$0xff]
    %v394 = vld [vmem:[#allocation2 + $0x70] sm:$0xff]
    %v395 = vld [vmem:[#allocation2 + $0x78] sm:$0xff]
    %396 = vmax.xlane.f32.xlu0 %v364
    %v397 = vpop.xlane.xlu0 %396
    %398 = vmax.xlane.f32.xlu0 %v365
    %v399 = vpop.xlane.xlu0 %398
    %400 = vmax.xlane.f32.xlu0 %v366
    %v401 = vpop.xlane.xlu0 %400
    %402 = vmax.xlane.f32.xlu0 %v367
    %v403 = vpop.xlane.xlu0 %402
    %404 = vmax.xlane.f32.xlu0 %v368
    %v405 = vpop.xlane.xlu0 %404
    %406 = vmax.xlane.f32.xlu0 %v369
    %v407 = vpop.xlane.xlu0 %406
    %408 = vmax.xlane.f32.xlu0 %v370
    %v409 = vpop.xlane.xlu0 %408
    %410 = vmax.xlane.f32.xlu0 %v371
    %v411 = vpop.xlane.xlu0 %410
    %412 = vmax.xlane.f32.xlu0 %v372
    %v413 = vpop.xlane.xlu0 %412
    %414 = vmax.xlane.f32.xlu0 %v373
    %v415 = vpop.xlane.xlu0 %414
    %416 = vmax.xlane.f32.xlu0 %v374
    %v417 = vpop.xlane.xlu0 %416
    %418 = vmax.xlane.f32.xlu0 %v375
    %v419 = vpop.xlane.xlu0 %418
    %420 = vmax.xlane.f32.xlu0 %v376
    %v421 = vpop.xlane.xlu0 %420
    %422 = vmax.xlane.f32.xlu0 %v377
    %v423 = vpop.xlane.xlu0 %422
    %424 = vmax.xlane.f32.xlu0 %v378
    %v425 = vpop.xlane.xlu0 %424
    %426 = vmax.xlane.f32.xlu0 %v379
    %v427 = vpop.xlane.xlu0 %426
    %v428 = vmax.f32 %v380, %v397
    %v429 = vmax.f32 %v381, %v399
    %v430 = vmax.f32 %v382, %v401
    %v431 = vmax.f32 %v383, %v403
    %v432 = vmax.f32 %v384, %v405
    %v433 = vmax.f32 %v385, %v407
    %v434 = vmax.f32 %v386, %v409
    %v435 = vmax.f32 %v387, %v411
    %v436 = vmax.f32 %v388, %v413
    %v437 = vmax.f32 %v389, %v415
    %v438 = vmax.f32 %v390, %v417
    %v439 = vmax.f32 %v391, %v419
    %v440 = vmax.f32 %v392, %v421
    %v441 = vmax.f32 %v393, %v423
    %v442 = vmax.f32 %v394, %v425
    %v443 = vmax.f32 %v395, %v427
    %v444 = vsub.f32 %v380, %v428
    %v445 = vsub.f32 %v381, %v429
    %v446 = vsub.f32 %v382, %v430
    %v447 = vsub.f32 %v383, %v431
    %v448 = vsub.f32 %v384, %v432
    %v449 = vsub.f32 %v385, %v433
    %v450 = vsub.f32 %v386, %v434
    %v451 = vsub.f32 %v387, %v435
    %v452 = vsub.f32 %v388, %v436
    %v453 = vsub.f32 %v389, %v437
    %v454 = vsub.f32 %v390, %v438
    %v455 = vsub.f32 %v391, %v439
    %v456 = vsub.f32 %v392, %v440
    %v457 = vsub.f32 %v393, %v441
    %v458 = vsub.f32 %v394, %v442
    %v459 = vsub.f32 %v395, %v443
    %v460 = vmul.f32 %v444, 1.442695
    %v461 = vpow.pop %v460
    %v462 = vmul.f32 %v445, 1.442695
    %v463 = vpow.pop %v462
    %v464 = vmul.f32 %v446, 1.442695
    %v465 = vpow.pop %v464
    %v466 = vmul.f32 %v447, 1.442695
    %v467 = vpow.pop %v466
    %v468 = vmul.f32 %v448, 1.442695
    %v469 = vpow.pop %v468
    %v470 = vmul.f32 %v449, 1.442695
    %v471 = vpow.pop %v470
    %v472 = vmul.f32 %v450, 1.442695
    %v473 = vpow.pop %v472
    %v474 = vmul.f32 %v451, 1.442695
    %v475 = vpow.pop %v474
    %v476 = vmul.f32 %v452, 1.442695
    %v477 = vpow.pop %v476
    %v478 = vmul.f32 %v453, 1.442695
    %v479 = vpow.pop %v478
    %v480 = vmul.f32 %v454, 1.442695
    %v481 = vpow.pop %v480
    %v482 = vmul.f32 %v455, 1.442695
    %v483 = vpow.pop %v482
    %v484 = vmul.f32 %v456, 1.442695
    %v485 = vpow.pop %v484
    %v486 = vmul.f32 %v457, 1.442695
    %v487 = vpow.pop %v486
    %v488 = vmul.f32 %v458, 1.442695
    %v489 = vpow.pop %v488
    %v490 = vmul.f32 %v459, 1.442695
    %v491 = vpow.pop %v490
    %493 = vset.pattern.permute.xlu0 0
    %494 = vperm.xlu0 %493, %v428
    %v495 = vpop.permute.xlu0 %494
    %498 = vset.pattern.permute.xlu0 0
    %499 = vperm.xlu0 %498, %v429
    %v500 = vpop.permute.xlu0 %499
    %503 = vset.pattern.permute.xlu0 0
    %504 = vperm.xlu0 %503, %v430
    %v505 = vpop.permute.xlu0 %504
    %508 = vset.pattern.permute.xlu0 0
    %509 = vperm.xlu0 %508, %v431
    %v510 = vpop.permute.xlu0 %509
    %513 = vset.pattern.permute.xlu0 0
    %514 = vperm.xlu0 %513, %v432
    %v515 = vpop.permute.xlu0 %514
    %518 = vset.pattern.permute.xlu0 0
    %519 = vperm.xlu0 %518, %v433
    %v520 = vpop.permute.xlu0 %519
    %523 = vset.pattern.permute.xlu0 0
    %524 = vperm.xlu0 %523, %v434
    %v525 = vpop.permute.xlu0 %524
    %528 = vset.pattern.permute.xlu0 0
    %529 = vperm.xlu0 %528, %v435
    %v530 = vpop.permute.xlu0 %529
    %533 = vset.pattern.permute.xlu0 0
    %534 = vperm.xlu0 %533, %v436
    %v535 = vpop.permute.xlu0 %534
    %538 = vset.pattern.permute.xlu0 0
    %539 = vperm.xlu0 %538, %v437
    %v540 = vpop.permute.xlu0 %539
    %543 = vset.pattern.permute.xlu0 0
    %544 = vperm.xlu0 %543, %v438
    %v545 = vpop.permute.xlu0 %544
    %548 = vset.pattern.permute.xlu0 0
    %549 = vperm.xlu0 %548, %v439
    %v550 = vpop.permute.xlu0 %549
    %553 = vset.pattern.permute.xlu0 0
    %554 = vperm.xlu0 %553, %v440
    %v555 = vpop.permute.xlu0 %554
    %558 = vset.pattern.permute.xlu0 0
    %559 = vperm.xlu0 %558, %v441
    %v560 = vpop.permute.xlu0 %559
    %563 = vset.pattern.permute.xlu0 0
    %564 = vperm.xlu0 %563, %v442
    %v565 = vpop.permute.xlu0 %564
    %568 = vset.pattern.permute.xlu0 0
    %569 = vperm.xlu0 %568, %v443
    %v570 = vpop.permute.xlu0 %569
    %v572 = vsub.f32 %v364, %v495
    %v573 = vsub.f32 %v365, %v500
    %v574 = vsub.f32 %v366, %v505
    %v575 = vsub.f32 %v367, %v510
    %v576 = vsub.f32 %v368, %v515
    %v577 = vsub.f32 %v369, %v520
    %v578 = vsub.f32 %v370, %v525
    %v579 = vsub.f32 %v371, %v530
    %v580 = vsub.f32 %v372, %v535
    %v581 = vsub.f32 %v373, %v540
    %v582 = vsub.f32 %v374, %v545
    %v583 = vsub.f32 %v375, %v550
    %v584 = vsub.f32 %v376, %v555
    %v585 = vsub.f32 %v377, %v560
    %v586 = vsub.f32 %v378, %v565
    %v587 = vsub.f32 %v379, %v570
    %v588 = vmul.f32 %v572, 1.442695
    %v589 = vpow.pop %v588
    %v590 = vmul.f32 %v573, 1.442695
    %v591 = vpow.pop %v590
    %v592 = vmul.f32 %v574, 1.442695
    %v593 = vpow.pop %v592
    %v594 = vmul.f32 %v575, 1.442695
    %v595 = vpow.pop %v594
    %v596 = vmul.f32 %v576, 1.442695
    %v597 = vpow.pop %v596
    %v598 = vmul.f32 %v577, 1.442695
    %v599 = vpow.pop %v598
    %v600 = vmul.f32 %v578, 1.442695
    %v601 = vpow.pop %v600
    %v602 = vmul.f32 %v579, 1.442695
    %v603 = vpow.pop %v602
    %v604 = vmul.f32 %v580, 1.442695
    %v605 = vpow.pop %v604
    %v606 = vmul.f32 %v581, 1.442695
    %v607 = vpow.pop %v606
    %v608 = vmul.f32 %v582, 1.442695
    %v609 = vpow.pop %v608
    %v610 = vmul.f32 %v583, 1.442695
    %v611 = vpow.pop %v610
    %v612 = vmul.f32 %v584, 1.442695
    %v613 = vpow.pop %v612
    %v614 = vmul.f32 %v585, 1.442695
    %v615 = vpow.pop %v614
    %v616 = vmul.f32 %v586, 1.442695
    %v617 = vpow.pop %v616
    %v618 = vmul.f32 %v587, 1.442695
    %v619 = vpow.pop %v618
    %v620 = vsel %vm348, %v589, 0.0
    %v621 = vsel %vm349, %v591, 0.0
    %v622 = vsel %vm350, %v593, 0.0
    %v623 = vsel %vm351, %v595, 0.0
    %v624 = vsel %vm352, %v597, 0.0
    %v625 = vsel %vm353, %v599, 0.0
    %v626 = vsel %vm354, %v601, 0.0
    %v627 = vsel %vm355, %v603, 0.0
    %v628 = vsel %vm356, %v605, 0.0
    %v629 = vsel %vm357, %v607, 0.0
    %v630 = vsel %vm358, %v609, 0.0
    %v631 = vsel %vm359, %v611, 0.0
    %v632 = vsel %vm360, %v613, 0.0
    %v633 = vsel %vm361, %v615, 0.0
    %v634 = vsel %vm362, %v617, 0.0
    %v635 = vsel %vm363, %v619, 0.0
    %v636 = vld [vmem:[#allocation3] sm:$0xff]
    %v637 = vld [vmem:[#allocation3 + $0x8] sm:$0xff]
    %v638 = vld [vmem:[#allocation3 + $0x10] sm:$0xff]
    %v639 = vld [vmem:[#allocation3 + $0x18] sm:$0xff]
    %v640 = vld [vmem:[#allocation3 + $0x20] sm:$0xff]
    %v641 = vld [vmem:[#allocation3 + $0x28] sm:$0xff]
    %v642 = vld [vmem:[#allocation3 + $0x30] sm:$0xff]
    %v643 = vld [vmem:[#allocation3 + $0x38] sm:$0xff]
    %v644 = vld [vmem:[#allocation3 + $0x40] sm:$0xff]
    %v645 = vld [vmem:[#allocation3 + $0x48] sm:$0xff]
    %v646 = vld [vmem:[#allocation3 + $0x50] sm:$0xff]
    %v647 = vld [vmem:[#allocation3 + $0x58] sm:$0xff]
    %v648 = vld [vmem:[#allocation3 + $0x60] sm:$0xff]
    %v649 = vld [vmem:[#allocation3 + $0x68] sm:$0xff]
    %v650 = vld [vmem:[#allocation3 + $0x70] sm:$0xff]
    %v651 = vld [vmem:[#allocation3 + $0x78] sm:$0xff]
    %v652 = vmul.f32 %v461, %v636
    %v653 = vmul.f32 %v463, %v637
    %v654 = vmul.f32 %v465, %v638
    %v655 = vmul.f32 %v467, %v639
    %v656 = vmul.f32 %v469, %v640
    %v657 = vmul.f32 %v471, %v641
    %v658 = vmul.f32 %v473, %v642
    %v659 = vmul.f32 %v475, %v643
    %v660 = vmul.f32 %v477, %v644
    %v661 = vmul.f32 %v479, %v645
    %v662 = vmul.f32 %v481, %v646
    %v663 = vmul.f32 %v483, %v647
    %v664 = vmul.f32 %v485, %v648
    %v665 = vmul.f32 %v487, %v649
    %v666 = vmul.f32 %v489, %v650
    %v667 = vmul.f32 %v491, %v651
    %668 = vadd.xlane.f32.xlu0 %v620
    %v669 = vpop.xlane.xlu0 %668
    %670 = vadd.xlane.f32.xlu0 %v621
    %v671 = vpop.xlane.xlu0 %670
    %672 = vadd.xlane.f32.xlu0 %v622
    %v673 = vpop.xlane.xlu0 %672
    %674 = vadd.xlane.f32.xlu0 %v623
    %v675 = vpop.xlane.xlu0 %674
    %676 = vadd.xlane.f32.xlu0 %v624
    %v677 = vpop.xlane.xlu0 %676
    %678 = vadd.xlane.f32.xlu0 %v625
    %v679 = vpop.xlane.xlu0 %678
    %680 = vadd.xlane.f32.xlu0 %v626
    %v681 = vpop.xlane.xlu0 %680
    %682 = vadd.xlane.f32.xlu0 %v627
    %v683 = vpop.xlane.xlu0 %682
    %684 = vadd.xlane.f32.xlu0 %v628
    %v685 = vpop.xlane.xlu0 %684
    %686 = vadd.xlane.f32.xlu0 %v629
    %v687 = vpop.xlane.xlu0 %686
    %688 = vadd.xlane.f32.xlu0 %v630
    %v689 = vpop.xlane.xlu0 %688
    %690 = vadd.xlane.f32.xlu0 %v631
    %v691 = vpop.xlane.xlu0 %690
    %692 = vadd.xlane.f32.xlu0 %v632
    %v693 = vpop.xlane.xlu0 %692
    %694 = vadd.xlane.f32.xlu0 %v633
    %v695 = vpop.xlane.xlu0 %694
    %696 = vadd.xlane.f32.xlu0 %v634
    %v697 = vpop.xlane.xlu0 %696
    %698 = vadd.xlane.f32.xlu0 %v635
    %v699 = vpop.xlane.xlu0 %698
    %v700 = vadd.f32 %v652, %v669
    %v701 = vadd.f32 %v653, %v671
    %v702 = vadd.f32 %v654, %v673
    %v703 = vadd.f32 %v655, %v675
    %v704 = vadd.f32 %v656, %v677
    %v705 = vadd.f32 %v657, %v679
    %v706 = vadd.f32 %v658, %v681
    %v707 = vadd.f32 %v659, %v683
    %v708 = vadd.f32 %v660, %v685
    %v709 = vadd.f32 %v661, %v687
    %v710 = vadd.f32 %v662, %v689
    %v711 = vadd.f32 %v663, %v691
    %v712 = vadd.f32 %v664, %v693
    %v713 = vadd.f32 %v665, %v695
    %v714 = vadd.f32 %v666, %v697
    %v715 = vadd.f32 %v667, %v699
    %vm716 = vcmask 7168
    %717 = vst.msk [vmem:[#allocation3] sm:$0xff] %vm716, %v700
    %718 = vst.msk [vmem:[#allocation3 + $0x8] sm:$0xff] %vm716, %v701
    %719 = vst.msk [vmem:[#allocation3 + $0x10] sm:$0xff] %vm716, %v702
    %720 = vst.msk [vmem:[#allocation3 + $0x18] sm:$0xff] %vm716, %v703
    %721 = vst.msk [vmem:[#allocation3 + $0x20] sm:$0xff] %vm716, %v704
    %722 = vst.msk [vmem:[#allocation3 + $0x28] sm:$0xff] %vm716, %v705
    %723 = vst.msk [vmem:[#allocation3 + $0x30] sm:$0xff] %vm716, %v706
    %724 = vst.msk [vmem:[#allocation3 + $0x38] sm:$0xff] %vm716, %v707
    %725 = vst.msk [vmem:[#allocation3 + $0x40] sm:$0xff] %vm716, %v708
    %726 = vst.msk [vmem:[#allocation3 + $0x48] sm:$0xff] %vm716, %v709
    %727 = vst.msk [vmem:[#allocation3 + $0x50] sm:$0xff] %vm716, %v710
    %728 = vst.msk [vmem:[#allocation3 + $0x58] sm:$0xff] %vm716, %v711
    %729 = vst.msk [vmem:[#allocation3 + $0x60] sm:$0xff] %vm716, %v712
    %730 = vst.msk [vmem:[#allocation3 + $0x68] sm:$0xff] %vm716, %v713
    %731 = vst.msk [vmem:[#allocation3 + $0x70] sm:$0xff] %vm716, %v714
    %732 = vst.msk [vmem:[#allocation3 + $0x78] sm:$0xff] %vm716, %v715
    %v733 = vld [vmem:[#allocation4] sm:$0xff]
    %v734 = vld [vmem:[#allocation4 + $0x8] sm:$0xff]
    %v735 = vld [vmem:[#allocation4 + $0x10] sm:$0xff]
    %v736 = vld [vmem:[#allocation4 + $0x18] sm:$0xff]
    %v737 = vld [vmem:[#allocation4 + $0x20] sm:$0xff]
    %v738 = vld [vmem:[#allocation4 + $0x28] sm:$0xff]
    %v739 = vld [vmem:[#allocation4 + $0x30] sm:$0xff]
    %v740 = vld [vmem:[#allocation4 + $0x38] sm:$0xff]
    %v741 = vld [vmem:[#allocation4 + $0x40] sm:$0xff]
    %v742 = vld [vmem:[#allocation4 + $0x48] sm:$0xff]
    %v743 = vld [vmem:[#allocation4 + $0x50] sm:$0xff]
    %v744 = vld [vmem:[#allocation4 + $0x58] sm:$0xff]
    %v745 = vld [vmem:[#allocation4 + $0x60] sm:$0xff]
    %v746 = vld [vmem:[#allocation4 + $0x68] sm:$0xff]
    %v747 = vld [vmem:[#allocation4 + $0x70] sm:$0xff]
    %v748 = vld [vmem:[#allocation4 + $0x78] sm:$0xff]
    %750 = vset.pattern.permute.xlu0 0
    %751 = vperm.xlu0 %750, %v461
    %v752 = vpop.permute.xlu0 %751
    %755 = vset.pattern.permute.xlu0 0
    %756 = vperm.xlu0 %755, %v463
    %v757 = vpop.permute.xlu0 %756
    %760 = vset.pattern.permute.xlu0 0
    %761 = vperm.xlu0 %760, %v465
    %v762 = vpop.permute.xlu0 %761
    %765 = vset.pattern.permute.xlu0 0
    %766 = vperm.xlu0 %765, %v467
    %v767 = vpop.permute.xlu0 %766
    %770 = vset.pattern.permute.xlu0 0
    %771 = vperm.xlu0 %770, %v469
    %v772 = vpop.permute.xlu0 %771
    %775 = vset.pattern.permute.xlu0 0
    %776 = vperm.xlu0 %775, %v471
    %v777 = vpop.permute.xlu0 %776
    %780 = vset.pattern.permute.xlu0 0
    %781 = vperm.xlu0 %780, %v473
    %v782 = vpop.permute.xlu0 %781
    %785 = vset.pattern.permute.xlu0 0
    %786 = vperm.xlu0 %785, %v475
    %v787 = vpop.permute.xlu0 %786
    %790 = vset.pattern.permute.xlu0 0
    %791 = vperm.xlu0 %790, %v477
    %v792 = vpop.permute.xlu0 %791
    %795 = vset.pattern.permute.xlu0 0
    %796 = vperm.xlu0 %795, %v479
    %v797 = vpop.permute.xlu0 %796
    %800 = vset.pattern.permute.xlu0 0
    %801 = vperm.xlu0 %800, %v481
    %v802 = vpop.permute.xlu0 %801
    %805 = vset.pattern.permute.xlu0 0
    %806 = vperm.xlu0 %805, %v483
    %v807 = vpop.permute.xlu0 %806
    %810 = vset.pattern.permute.xlu0 0
    %811 = vperm.xlu0 %810, %v485
    %v812 = vpop.permute.xlu0 %811
    %815 = vset.pattern.permute.xlu0 0
    %816 = vperm.xlu0 %815, %v487
    %v817 = vpop.permute.xlu0 %816
    %820 = vset.pattern.permute.xlu0 0
    %821 = vperm.xlu0 %820, %v489
    %v822 = vpop.permute.xlu0 %821
    %825 = vset.pattern.permute.xlu0 0
    %826 = vperm.xlu0 %825, %v491
    %v827 = vpop.permute.xlu0 %826
    %v829 = vmul.f32 %v752, %v733
    %v830 = vmul.f32 %v757, %v734
    %v831 = vmul.f32 %v762, %v735
    %v832 = vmul.f32 %v767, %v736
    %v833 = vmul.f32 %v772, %v737
    %v834 = vmul.f32 %v777, %v738
    %v835 = vmul.f32 %v782, %v739
    %v836 = vmul.f32 %v787, %v740
    %v837 = vmul.f32 %v792, %v741
    %v838 = vmul.f32 %v797, %v742
    %v839 = vmul.f32 %v802, %v743
    %v840 = vmul.f32 %v807, %v744
    %v841 = vmul.f32 %v812, %v745
    %v842 = vmul.f32 %v817, %v746
    %v843 = vmul.f32 %v822, %v747
    %v844 = vmul.f32 %v827, %v748
    %v845 = vpack.c.bf16 %v621, %v620
    %v846 = vpack.c.bf16 %v623, %v622
    %v847 = vpack.c.bf16 %v625, %v624
    %v848 = vpack.c.bf16 %v627, %v626
    %v849 = vpack.c.bf16 %v629, %v628
    %v850 = vpack.c.bf16 %v631, %v630
    %v851 = vpack.c.bf16 %v633, %v632
    %v852 = vpack.c.bf16 %v635, %v634
    %v853 = vld [vmem:[%s3] sm:$0xf]
    %v854 = vld [vmem:[%s3 + $0x4] sm:$0xf]
    %v855 = vld [vmem:[%s3 + $0x8] sm:$0xf]
    %v856 = vld [vmem:[%s3 + $0xc] sm:$0xf]
    %v857 = vld [vmem:[%s3 + $0x10] sm:$0xf]
    %v858 = vld [vmem:[%s3 + $0x14] sm:$0xf]
    %v859 = vld [vmem:[%s3 + $0x18] sm:$0xf]
    %v860 = vld [vmem:[%s3 + $0x1c] sm:$0xf]
    %v861 = vld [vmem:[%s3 + $0x20] sm:$0xf]
    %v862 = vld [vmem:[%s3 + $0x24] sm:$0xf]
    %v863 = vld [vmem:[%s3 + $0x28] sm:$0xf]
    %v864 = vld [vmem:[%s3 + $0x2c] sm:$0xf]
    %v865 = vld [vmem:[%s3 + $0x30] sm:$0xf]
    %v866 = vld [vmem:[%s3 + $0x34] sm:$0xf]
    %v867 = vld [vmem:[%s3 + $0x38] sm:$0xf]
    %v868 = vld [vmem:[%s3 + $0x3c] sm:$0xf]
    %v885 = vunpack.c.l.b16 %v853
    %v886 = vunpack.c.l.b16 %v854
    %v887 = vunpack.c.l.b16 %v855
    %v888 = vunpack.c.l.b16 %v856
    %v889 = vunpack.c.l.b16 %v857
    %v890 = vunpack.c.l.b16 %v858
    %v891 = vunpack.c.l.b16 %v859
    %v892 = vunpack.c.l.b16 %v860
    %v893 = vunpack.c.l.b16 %v861
    %v894 = vunpack.c.l.b16 %v862
    %v895 = vunpack.c.l.b16 %v863
    %v896 = vunpack.c.l.b16 %v864
    %v897 = vunpack.c.l.b16 %v865
    %v898 = vunpack.c.l.b16 %v866
    %v899 = vunpack.c.l.b16 %v867
    %v900 = vunpack.c.l.b16 %v868
    %v901 = vpack.c.b16 %v886, %v885
    %v902 = vpack.c.b16 %v888, %v887
    %v903 = vpack.c.b16 %v890, %v889
    %v904 = vpack.c.b16 %v892, %v891
    %v905 = vpack.c.b16 %v894, %v893
    %v906 = vpack.c.b16 %v896, %v895
    %v907 = vpack.c.b16 %v898, %v897
    %v908 = vpack.c.b16 %v900, %v899
    %917 = vmatpush.bf16.msra.mxu0 %v908
    %918 = vmatpush.bf16.msra.mxu0 %v907
    %919 = vmatpush.bf16.msra.mxu0 %v906
    %920 = vmatpush.bf16.msra.mxu0 %v905
    %921 = vmatpush.bf16.msra.mxu0 %v904
    %922 = vmatpush.bf16.msra.mxu0 %v903
    %923 = vmatpush.bf16.msra.mxu0 %v902
    %924 = vmatpush.bf16.msra.mxu0 %v901
    %925 = vmatmul.bf16.gmra.mxu0 %v845
    %v926 = vpop.f32.mrf.mxu0
    %v927 = vadd.f32 0.0, %v926
    %v928 = vpop.f32.mrf.mxu0
    %v929 = vadd.f32 0.0, %v928
    %930 = vmatmul.bf16.gmra.mxu0 %v846
    %v931 = vpop.f32.mrf.mxu0
    %v932 = vadd.f32 0.0, %v931
    %v933 = vpop.f32.mrf.mxu0
    %v934 = vadd.f32 0.0, %v933
    %935 = vmatmul.bf16.gmra.mxu0 %v847
    %v936 = vpop.f32.mrf.mxu0
    %v937 = vadd.f32 0.0, %v936
    %v938 = vpop.f32.mrf.mxu0
    %v939 = vadd.f32 0.0, %v938
    %940 = vmatmul.bf16.gmra.mxu0 %v848
    %v941 = vpop.f32.mrf.mxu0
    %v942 = vadd.f32 0.0, %v941
    %v943 = vpop.f32.mrf.mxu0
    %v944 = vadd.f32 0.0, %v943
    %945 = vmatmul.bf16.gmra.mxu0 %v849
    %v946 = vpop.f32.mrf.mxu0
    %v947 = vadd.f32 0.0, %v946
    %v948 = vpop.f32.mrf.mxu0
    %v949 = vadd.f32 0.0, %v948
    %950 = vmatmul.bf16.gmra.mxu0 %v850
    %v951 = vpop.f32.mrf.mxu0
    %v952 = vadd.f32 0.0, %v951
    %v953 = vpop.f32.mrf.mxu0
    %v954 = vadd.f32 0.0, %v953
    %955 = vmatmul.bf16.gmra.mxu0 %v851
    %v956 = vpop.f32.mrf.mxu0
    %v957 = vadd.f32 0.0, %v956
    %v958 = vpop.f32.mrf.mxu0
    %v959 = vadd.f32 0.0, %v958
    %960 = vmatmul.bf16.gmra.mxu0 %v852
    %v961 = vpop.f32.mrf.mxu0
    %v962 = vadd.f32 0.0, %v961
    %v963 = vpop.f32.mrf.mxu0
    %v964 = vadd.f32 0.0, %v963
    %965 = vdwg.mxu0
    %v966 = vadd.f32 %v829, %v927
    %v967 = vadd.f32 %v830, %v929
    %v968 = vadd.f32 %v831, %v932
    %v969 = vadd.f32 %v832, %v934
    %v970 = vadd.f32 %v833, %v937
    %v971 = vadd.f32 %v834, %v939
    %v972 = vadd.f32 %v835, %v942
    %v973 = vadd.f32 %v836, %v944
    %v974 = vadd.f32 %v837, %v947
    %v975 = vadd.f32 %v838, %v949
    %v976 = vadd.f32 %v839, %v952
    %v977 = vadd.f32 %v840, %v954
    %v978 = vadd.f32 %v841, %v957
    %v979 = vadd.f32 %v842, %v959
    %v980 = vadd.f32 %v843, %v962
    %v981 = vadd.f32 %v844, %v964
    %982 = vst [vmem:[#allocation4] sm:$0xff] %v966
    %983 = vst [vmem:[#allocation4 + $0x8] sm:$0xff] %v967
    %984 = vst [vmem:[#allocation4 + $0x10] sm:$0xff] %v968
    %985 = vst [vmem:[#allocation4 + $0x18] sm:$0xff] %v969
    %986 = vst [vmem:[#allocation4 + $0x20] sm:$0xff] %v970
    %987 = vst [vmem:[#allocation4 + $0x28] sm:$0xff] %v971
    %988 = vst [vmem:[#allocation4 + $0x30] sm:$0xff] %v972
    %989 = vst [vmem:[#allocation4 + $0x38] sm:$0xff] %v973
    %990 = vst [vmem:[#allocation4 + $0x40] sm:$0xff] %v974
    %991 = vst [vmem:[#allocation4 + $0x48] sm:$0xff] %v975
    %992 = vst [vmem:[#allocation4 + $0x50] sm:$0xff] %v976
    %993 = vst [vmem:[#allocation4 + $0x58] sm:$0xff] %v977
    %994 = vst [vmem:[#allocation4 + $0x60] sm:$0xff] %v978
    %995 = vst [vmem:[#allocation4 + $0x68] sm:$0xff] %v979
    %996 = vst [vmem:[#allocation4 + $0x70] sm:$0xff] %v980
    %997 = vst [vmem:[#allocation4 + $0x78] sm:$0xff] %v981
    %998 = vst.msk [vmem:[#allocation2] sm:$0xff] %vm716, %v428
    %999 = vst.msk [vmem:[#allocation2 + $0x8] sm:$0xff] %vm716, %v429
    %1000 = vst.msk [vmem:[#allocation2 + $0x10] sm:$0xff] %vm716, %v430
    %1001 = vst.msk [vmem:[#allocation2 + $0x18] sm:$0xff] %vm716, %v431
    %1002 = vst.msk [vmem:[#allocation2 + $0x20] sm:$0xff] %vm716, %v432
    %1003 = vst.msk [vmem:[#allocation2 + $0x28] sm:$0xff] %vm716, %v433
    %1004 = vst.msk [vmem:[#allocation2 + $0x30] sm:$0xff] %vm716, %v434
    %1005 = vst.msk [vmem:[#allocation2 + $0x38] sm:$0xff] %vm716, %v435
    %1006 = vst.msk [vmem:[#allocation2 + $0x40] sm:$0xff] %vm716, %v436
    %1007 = vst.msk [vmem:[#allocation2 + $0x48] sm:$0xff] %vm716, %v437
    %1008 = vst.msk [vmem:[#allocation2 + $0x50] sm:$0xff] %vm716, %v438
    %1009 = vst.msk [vmem:[#allocation2 + $0x58] sm:$0xff] %vm716, %v439
    %1010 = vst.msk [vmem:[#allocation2 + $0x60] sm:$0xff] %vm716, %v440
    %1011 = vst.msk [vmem:[#allocation2 + $0x68] sm:$0xff] %vm716, %v441
    %1012 = vst.msk [vmem:[#allocation2 + $0x70] sm:$0xff] %vm716, %v442
    %1013 = vst.msk [vmem:[#allocation2 + $0x78] sm:$0xff] %vm716, %v443
    // Predicated region
    $region26: #{tpu_custom_call.1} parent=1 // pred_check
      %p1014 = pneg %p23
    $region27: #{tpu_custom_call.1} parent=1 // pred_check_branch
      %1016 = sbr.rel (%p1014) target = $region29
    $region28: #{tpu_custom_call.1} parent=1 // pred_region
      %v1017 = vld [vmem:[#allocation3] sm:$0xff]
      %v1018 = vld [vmem:[#allocation3 + $0x8] sm:$0xff]
      %v1019 = vld [vmem:[#allocation3 + $0x10] sm:$0xff]
      %v1020 = vld [vmem:[#allocation3 + $0x18] sm:$0xff]
      %v1021 = vld [vmem:[#allocation3 + $0x20] sm:$0xff]
      %v1022 = vld [vmem:[#allocation3 + $0x28] sm:$0xff]
      %v1023 = vld [vmem:[#allocation3 + $0x30] sm:$0xff]
      %v1024 = vld [vmem:[#allocation3 + $0x38] sm:$0xff]
      %v1025 = vld [vmem:[#allocation3 + $0x40] sm:$0xff]
      %v1026 = vld [vmem:[#allocation3 + $0x48] sm:$0xff]
      %v1027 = vld [vmem:[#allocation3 + $0x50] sm:$0xff]
      %v1028 = vld [vmem:[#allocation3 + $0x58] sm:$0xff]
      %v1029 = vld [vmem:[#allocation3 + $0x60] sm:$0xff]
      %v1030 = vld [vmem:[#allocation3 + $0x68] sm:$0xff]
      %v1031 = vld [vmem:[#allocation3 + $0x70] sm:$0xff]
      %v1032 = vld [vmem:[#allocation3 + $0x78] sm:$0xff]
      %vm1033 = vcmp.gt.f32.partialorder %v1017, 0.0
      %vm1034 = vcmp.gt.f32.partialorder %v1018, 0.0
      %vm1035 = vcmp.gt.f32.partialorder %v1019, 0.0
      %vm1036 = vcmp.gt.f32.partialorder %v1020, 0.0
      %vm1037 = vcmp.gt.f32.partialorder %v1021, 0.0
      %vm1038 = vcmp.gt.f32.partialorder %v1022, 0.0
      %vm1039 = vcmp.gt.f32.partialorder %v1023, 0.0
      %vm1040 = vcmp.gt.f32.partialorder %v1024, 0.0
      %vm1041 = vcmp.gt.f32.partialorder %v1025, 0.0
      %vm1042 = vcmp.gt.f32.partialorder %v1026, 0.0
      %vm1043 = vcmp.gt.f32.partialorder %v1027, 0.0
      %vm1044 = vcmp.gt.f32.partialorder %v1028, 0.0
      %vm1045 = vcmp.gt.f32.partialorder %v1029, 0.0
      %vm1046 = vcmp.gt.f32.partialorder %v1030, 0.0
      %vm1047 = vcmp.gt.f32.partialorder %v1031, 0.0
      %vm1048 = vcmp.gt.f32.partialorder %v1032, 0.0
      %v1049 = vsel %vm1033, %v1017, 1.0
      %v1050 = vsel %vm1034, %v1018, 1.0
      %v1051 = vsel %vm1035, %v1019, 1.0
      %v1052 = vsel %vm1036, %v1020, 1.0
      %v1053 = vsel %vm1037, %v1021, 1.0
      %v1054 = vsel %vm1038, %v1022, 1.0
      %v1055 = vsel %vm1039, %v1023, 1.0
      %v1056 = vsel %vm1040, %v1024, 1.0
      %v1057 = vsel %vm1041, %v1025, 1.0
      %v1058 = vsel %vm1042, %v1026, 1.0
      %v1059 = vsel %vm1043, %v1027, 1.0
      %v1060 = vsel %vm1044, %v1028, 1.0
      %v1061 = vsel %vm1045, %v1029, 1.0
      %v1062 = vsel %vm1046, %v1030, 1.0
      %v1063 = vsel %vm1047, %v1031, 1.0
      %v1064 = vsel %vm1048, %v1032, 1.0
      %v1065 = vrcp.pop %v1049
      %v1066 = vrcp.pop %v1050
      %v1067 = vrcp.pop %v1051
      %v1068 = vrcp.pop %v1052
      %v1069 = vrcp.pop %v1053
      %v1070 = vrcp.pop %v1054
      %v1071 = vrcp.pop %v1055
      %v1072 = vrcp.pop %v1056
      %v1073 = vrcp.pop %v1057
      %v1074 = vrcp.pop %v1058
      %v1075 = vrcp.pop %v1059
      %v1076 = vrcp.pop %v1060
      %v1077 = vrcp.pop %v1061
      %v1078 = vrcp.pop %v1062
      %v1079 = vrcp.pop %v1063
      %v1080 = vrcp.pop %v1064
      %v1081 = vld [vmem:[#allocation4] sm:$0xff]
      %v1082 = vld [vmem:[#allocation4 + $0x8] sm:$0xff]
      %v1083 = vld [vmem:[#allocation4 + $0x10] sm:$0xff]
      %v1084 = vld [vmem:[#allocation4 + $0x18] sm:$0xff]
      %v1085 = vld [vmem:[#allocation4 + $0x20] sm:$0xff]
      %v1086 = vld [vmem:[#allocation4 + $0x28] sm:$0xff]
      %v1087 = vld [vmem:[#allocation4 + $0x30] sm:$0xff]
      %v1088 = vld [vmem:[#allocation4 + $0x38] sm:$0xff]
      %v1089 = vld [vmem:[#allocation4 + $0x40] sm:$0xff]
      %v1090 = vld [vmem:[#allocation4 + $0x48] sm:$0xff]
      %v1091 = vld [vmem:[#allocation4 + $0x50] sm:$0xff]
      %v1092 = vld [vmem:[#allocation4 + $0x58] sm:$0xff]
      %v1093 = vld [vmem:[#allocation4 + $0x60] sm:$0xff]
      %v1094 = vld [vmem:[#allocation4 + $0x68] sm:$0xff]
      %v1095 = vld [vmem:[#allocation4 + $0x70] sm:$0xff]
      %v1096 = vld [vmem:[#allocation4 + $0x78] sm:$0xff]
      %1098 = vset.pattern.permute.xlu0 0
      %1099 = vperm.xlu0 %1098, %v1065
      %v1100 = vpop.permute.xlu0 %1099
      %1103 = vset.pattern.permute.xlu0 0
      %1104 = vperm.xlu0 %1103, %v1066
      %v1105 = vpop.permute.xlu0 %1104
      %1108 = vset.pattern.permute.xlu0 0
      %1109 = vperm.xlu0 %1108, %v1067
      %v1110 = vpop.permute.xlu0 %1109
      %1113 = vset.pattern.permute.xlu0 0
      %1114 = vperm.xlu0 %1113, %v1068
      %v1115 = vpop.permute.xlu0 %1114
      %1118 = vset.pattern.permute.xlu0 0
      %1119 = vperm.xlu0 %1118, %v1069
      %v1120 = vpop.permute.xlu0 %1119
      %1123 = vset.pattern.permute.xlu0 0
      %1124 = vperm.xlu0 %1123, %v1070
      %v1125 = vpop.permute.xlu0 %1124
      %1128 = vset.pattern.permute.xlu0 0
      %1129 = vperm.xlu0 %1128, %v1071
      %v1130 = vpop.permute.xlu0 %1129
      %1133 = vset.pattern.permute.xlu0 0
      %1134 = vperm.xlu0 %1133, %v1072
      %v1135 = vpop.permute.xlu0 %1134
      %1138 = vset.pattern.permute.xlu0 0
      %1139 = vperm.xlu0 %1138, %v1073
      %v1140 = vpop.permute.xlu0 %1139
      %1143 = vset.pattern.permute.xlu0 0
      %1144 = vperm.xlu0 %1143, %v1074
      %v1145 = vpop.permute.xlu0 %1144
      %1148 = vset.pattern.permute.xlu0 0
      %1149 = vperm.xlu0 %1148, %v1075
      %v1150 = vpop.permute.xlu0 %1149
      %1153 = vset.pattern.permute.xlu0 0
      %1154 = vperm.xlu0 %1153, %v1076
      %v1155 = vpop.permute.xlu0 %1154
      %1158 = vset.pattern.permute.xlu0 0
      %1159 = vperm.xlu0 %1158, %v1077
      %v1160 = vpop.permute.xlu0 %1159
      %1163 = vset.pattern.permute.xlu0 0
      %1164 = vperm.xlu0 %1163, %v1078
      %v1165 = vpop.permute.xlu0 %1164
      %1168 = vset.pattern.permute.xlu0 0
      %1169 = vperm.xlu0 %1168, %v1079
      %v1170 = vpop.permute.xlu0 %1169
      %1173 = vset.pattern.permute.xlu0 0
      %1174 = vperm.xlu0 %1173, %v1080
      %v1175 = vpop.permute.xlu0 %1174
      %v1177 = vmul.f32 %v1081, %v1100
      %v1178 = vmul.f32 %v1082, %v1105
      %v1179 = vmul.f32 %v1083, %v1110
      %v1180 = vmul.f32 %v1084, %v1115
      %v1181 = vmul.f32 %v1085, %v1120
      %v1182 = vmul.f32 %v1086, %v1125
      %v1183 = vmul.f32 %v1087, %v1130
      %v1184 = vmul.f32 %v1088, %v1135
      %v1185 = vmul.f32 %v1089, %v1140
      %v1186 = vmul.f32 %v1090, %v1145
      %v1187 = vmul.f32 %v1091, %v1150
      %v1188 = vmul.f32 %v1092, %v1155
      %v1189 = vmul.f32 %v1093, %v1160
      %v1190 = vmul.f32 %v1094, %v1165
      %v1191 = vmul.f32 %v1095, %v1170
      %v1192 = vmul.f32 %v1096, %v1175
      %v1193 = vld [vmem:[%s4] sm:$0x1]
      %v1195 = vperm.slane %v1193, 0
      %v1197 = vadd.f32 %v1177, %v1195
      %v1198 = vadd.f32 %v1178, %v1195
      %v1199 = vadd.f32 %v1179, %v1195
      %v1200 = vadd.f32 %v1180, %v1195
      %v1201 = vadd.f32 %v1181, %v1195
      %v1202 = vadd.f32 %v1182, %v1195
      %v1203 = vadd.f32 %v1183, %v1195
      %v1204 = vadd.f32 %v1184, %v1195
      %v1205 = vadd.f32 %v1185, %v1195
      %v1206 = vadd.f32 %v1186, %v1195
      %v1207 = vadd.f32 %v1187, %v1195
      %v1208 = vadd.f32 %v1188, %v1195
      %v1209 = vadd.f32 %v1189, %v1195
      %v1210 = vadd.f32 %v1190, %v1195
      %v1211 = vadd.f32 %v1191, %v1195
      %v1212 = vadd.f32 %v1192, %v1195
      %v1213 = vmax.f32 %v1197, 0.0
      %v1214 = vmax.f32 %v1198, 0.0
      %v1215 = vmax.f32 %v1199, 0.0
      %v1216 = vmax.f32 %v1200, 0.0
      %v1217 = vmax.f32 %v1201, 0.0
      %v1218 = vmax.f32 %v1202, 0.0
      %v1219 = vmax.f32 %v1203, 0.0
      %v1220 = vmax.f32 %v1204, 0.0
      %v1221 = vmax.f32 %v1205, 0.0
      %v1222 = vmax.f32 %v1206, 0.0
      %v1223 = vmax.f32 %v1207, 0.0
      %v1224 = vmax.f32 %v1208, 0.0
      %v1225 = vmax.f32 %v1209, 0.0
      %v1226 = vmax.f32 %v1210, 0.0
      %v1227 = vmax.f32 %v1211, 0.0
      %v1228 = vmax.f32 %v1212, 0.0
      %1229 = vst [vmem:[#allocation5] sm:$0xff] %v1213
      %1230 = vst [vmem:[#allocation5 + $0x8] sm:$0xff] %v1214
      %1231 = vst [vmem:[#allocation5 + $0x10] sm:$0xff] %v1215
      %1232 = vst [vmem:[#allocation5 + $0x18] sm:$0xff] %v1216
      %1233 = vst [vmem:[#allocation5 + $0x20] sm:$0xff] %v1217
      %1234 = vst [vmem:[#allocation5 + $0x28] sm:$0xff] %v1218
      %1235 = vst [vmem:[#allocation5 + $0x30] sm:$0xff] %v1219
      %1236 = vst [vmem:[#allocation5 + $0x38] sm:$0xff] %v1220
      %1237 = vst [vmem:[#allocation5 + $0x40] sm:$0xff] %v1221
      %1238 = vst [vmem:[#allocation5 + $0x48] sm:$0xff] %v1222
      %1239 = vst [vmem:[#allocation5 + $0x50] sm:$0xff] %v1223
      %1240 = vst [vmem:[#allocation5 + $0x58] sm:$0xff] %v1224
      %1241 = vst [vmem:[#allocation5 + $0x60] sm:$0xff] %v1225
      %1242 = vst [vmem:[#allocation5 + $0x68] sm:$0xff] %v1226
      %1243 = vst [vmem:[#allocation5 + $0x70] sm:$0xff] %v1227
      %1244 = vst [vmem:[#allocation5 + $0x78] sm:$0xff] %v1228
    $region29: #{tpu_custom_call.1} parent=1 // pred_fallthru
      _
    // Predicated region
    $region30: #{tpu_custom_call.1} parent=1 // pred_check
      _
    $region31: #{tpu_custom_call.1} parent=1 // pred_check_branch
      %1246 = sbr.rel (0) target = $region33
    $region32: #{tpu_custom_call.1} parent=1 // pred_region
      %1248 = vsyncadd [#allocation6], 0
      %s1249 = sshll.u32 [#allocation5], 4
      %s1250 = int_to_ptr.vmem [resolvable:$true] %s1249
      %s1251 = sshll.u32 %s5, 4
      %s1252 = int_to_ptr.hbm [resolvable:$true] %s1251
      %1257 = dma.vmem_to_hbm [thread:$0]  %s1250, 2048, %s1252, [#allocation6], 128, 128, 8
    $region33: #{tpu_custom_call.1} parent=1 // pred_fallthru
      _
    // Predicated region
    $region34: #{tpu_custom_call.1} parent=1 // pred_check
      _
    $region35: #{tpu_custom_call.1} parent=1 // pred_check_branch
      %1259 = sbr.rel (0) target = $region37
    $region36: #{tpu_custom_call.1} parent=1 // pred_region
      %1261 = dma.done [#allocation6], 2048
    $region37: #{tpu_custom_call.1} parent=1 // pred_fallthru
      _
    %1262 = vsyncpa [#allocation6], 1

</llo_original>
